<compile_context>
chip_gen: v7x
topology: tpu7x:2x2x1
jax: 0.10.0
libtpu: 0.0.40
codegen_flags: <defaults>
</compile_context>

<pallas_src>
import functools

import jax
import jax.numpy as jnp
from jax import lax
from jax.experimental import pallas as pl
from jax.experimental.pallas import tpu as pltpu

HIDDEN = 768                 # BERT hidden size
HEAD_HIDDEN = 128            # first Linear output
NUM_LABELS = 2
LABEL_PAD = 128              # lane-dense output width (avoid masked vst on a width-2 store)
MAX_TS = 512                 # seq-tile cap (multiple of 8)
TARGET_BLOCK_BYTES = 16 << 20  # per-grid-step hidden-state block (double-buffered => 32 MiB)


def _round_up(x, m):
    return (x + m - 1) // m * m


def _choose_tiles(batch, seq, itemsize):
    """Adaptive (TB, TS): keep the streamed block near TARGET_BLOCK_BYTES and leave >=2
    batch tiles when the batch is big enough (v7x megacore split of the parallel axis)."""
    ts = seq if seq <= MAX_TS else MAX_TS            # ts == seq needs no 8-alignment
    row_bytes = ts * HIDDEN * itemsize
    tb = max(8, int(TARGET_BLOCK_BYTES // row_bytes) // 8 * 8)
    if batch >= 16:
        tb = min(tb, _round_up(pl.cdiv(batch, 2), 8))  # keep >=2 batch tiles for 2-TC chips
    if tb >= batch:
        tb = batch                                    # single full-batch tile (any size)
    return tb, ts


def classifier_head_kernel(h_ref, w1_ref, b1_ref, w2_ref, b2_ref, o_ref, acc_ref,
                           *, seq_rem):
    """Grid = (batch tiles, seq tiles).

    Streams (TB, TS, 768) hidden-state blocks in their native dtype, accumulates the
    sequence sum in an f32 scratch, and runs the Linear->Tanh->Linear head only on the
    final seq step (the mean's 1/S is pre-folded into w1)."""
    s = pl.program_id(1)
    n_seq = pl.num_programs(1)

    @pl.when(s == 0)
    def _():
        acc_ref[...] = jnp.zeros_like(acc_ref)

    if seq_rem == 0:
        # Exact seq tiling: plain convert+reduce (fused, no materialized f32 tile).
        acc_ref[...] += jnp.sum(h_ref[...], axis=1, dtype=jnp.float32)
    else:
        # Ragged last seq tile: mask out-of-bounds rows in-kernel (no HBM padding pass).
        @pl.when(s < n_seq - 1)
        def _():
            acc_ref[...] += jnp.sum(h_ref[...], axis=1, dtype=jnp.float32)

        @pl.when(s == n_seq - 1)
        def _():
            h = h_ref[...]
            pos = lax.broadcasted_iota(jnp.int32, h.shape, dimension=1)
            h = jnp.where(pos < seq_rem, h, jnp.zeros_like(h))
            acc_ref[...] += jnp.sum(h, axis=1, dtype=jnp.float32)

    @pl.when(s == n_seq - 1)
    def _():
        # acc holds sum_j h[:, j, :]; w1 was pre-scaled by 1/S, so this is the mean-pooled MLP.
        z1 = jnp.tanh(
            jnp.dot(acc_ref[...], w1_ref[...], preferred_element_type=jnp.float32)
            + b1_ref[...])                                   # (TB, 128)
        o_ref[...] = (
            jnp.dot(z1, w2_ref[...], preferred_element_type=jnp.float32)
            + b2_ref[...])                                   # (TB, LABEL_PAD)


def prepare_head_params(w1, b1, w2, b2, seq_len, num_labels=NUM_LABELS):
    """One-time prep (outside the per-inference path): fold the mean's 1/S into w1 and
    lane-pad the tiny label dimension to 128 so the kernel's output store is unmasked.
    Note: the prepared w1 is tied to a fixed sequence length."""
    w1_scaled = (w1 / float(seq_len)).astype(jnp.float32)
    b1_2d = b1.reshape(1, HEAD_HIDDEN).astype(jnp.float32)
    w2_pad = jnp.zeros((HEAD_HIDDEN, LABEL_PAD), jnp.float32).at[:, :num_labels].set(w2)
    b2_pad = jnp.zeros((1, LABEL_PAD), jnp.float32).at[:, :num_labels].set(b2.reshape(1, -1))
    return w1_scaled, b1_2d, w2_pad, b2_pad


@functools.partial(jax.jit, static_argnames=("num_labels",))
def text_classifier_forward(last_hidden_state, w1_scaled, b1_2d, w2_pad, b2_pad,
                            *, num_labels=NUM_LABELS):
    """last_hidden_state: (B, S, 768) in its native dtype; returns (B, num_labels) f32 logits.
    Pooling divides by the full S (matches torch.mean(dim=1), PAD tokens included)."""
    B, S, H = last_hidden_state.shape
    assert H == HIDDEN

    itemsize = jnp.dtype(last_hidden_state.dtype).itemsize
    TB, TS = _choose_tiles(B, S, itemsize)
    grid = (pl.cdiv(B, TB), pl.cdiv(S, TS))
    seq_rem = S % TS                                  # static; 0 when tiling is exact

    # VMEM budget: double-buffered input block + single-buffered weights + out + scratch
    # + margin; never below the 32 MiB default, never above 48 MiB (safe on v7x's 64 MiB).
    block_bytes = TB * TS * HIDDEN * itemsize
    weight_bytes = (HIDDEN * HEAD_HIDDEN + HEAD_HIDDEN
                    + HEAD_HIDDEN * LABEL_PAD + LABEL_PAD) * 4
    vmem_limit = int(min(
        48 << 20,
        max(32 << 20,
            2 * block_bytes + weight_bytes
            + 2 * TB * LABEL_PAD * 4 + TB * HIDDEN * 4 + (4 << 20))))

    kernel = functools.partial(classifier_head_kernel, seq_rem=seq_rem)

    out_padded = pl.pallas_call(
        kernel,
        out_shape=jax.ShapeDtypeStruct((B, LABEL_PAD), jnp.float32),
        grid_spec=pltpu.PrefetchScalarGridSpec(
            num_scalar_prefetch=0,
            grid=grid,
            in_specs=[
                pl.BlockSpec((TB, TS, HIDDEN), lambda i, s: (i, s, 0)),
                # Constant-index weights/biases: single-buffered to save VMEM & DMA traffic.
                pl.BlockSpec((HIDDEN, HEAD_HIDDEN), lambda i, s: (0, 0),
                             pipeline_mode=pl.Buffered(1)),
                pl.BlockSpec((1, HEAD_HIDDEN), lambda i, s: (0, 0),
                             pipeline_mode=pl.Buffered(1)),
                pl.BlockSpec((HEAD_HIDDEN, LABEL_PAD), lambda i, s: (0, 0),
                             pipeline_mode=pl.Buffered(1)),
                pl.BlockSpec((1, LABEL_PAD), lambda i, s: (0, 0),
                             pipeline_mode=pl.Buffered(1)),
            ],
            out_specs=pl.BlockSpec((TB, LABEL_PAD), lambda i, s: (i, 0)),
            scratch_shapes=[pltpu.VMEM((TB, HIDDEN), jnp.float32)],
        ),
        compiler_params=pltpu.CompilerParams(
            dimension_semantics=("parallel", "arbitrary"),
            vmem_limit_bytes=vmem_limit,
        ),
    )(last_hidden_state, w1_scaled, b1_2d, w2_pad, b2_pad)

    return out_padded[:, :num_labels]


def reference_forward(last_hidden_state, w1, b1, w2, b2):
    pooled = jnp.mean(last_hidden_state.astype(jnp.float32), axis=1)
    z1 = jnp.tanh(pooled @ w1 + b1)
    return z1 @ w2 + b2


if __name__ == "__main__":
    key = jax.random.PRNGKey(0)
    k_h, k_w1, k_b1, k_w2, k_b2 = jax.random.split(key, 5)

    B, S = 2, 8  # small batch / sequence length
    # Stand-in for outputs.last_hidden_state of shape (B, S, 768); streamed as-is (f32).
    last_hidden_state = jax.random.normal(k_h, (B, S, HIDDEN), jnp.float32)

    # Deterministic parameter init (shapes from nn.Linear(768,128) and nn.Linear(128,2)),
    # stored as [in, out] (transpose of PyTorch's weight layout).
    w1 = jax.random.normal(k_w1, (HIDDEN, HEAD_HIDDEN), jnp.float32) * 0.02
    b1 = jax.random.normal(k_b1, (HEAD_HIDDEN,), jnp.float32) * 0.02
    w2 = jax.random.normal(k_w2, (HEAD_HIDDEN, NUM_LABELS), jnp.float32) * 0.02
    b2 = jax.random.normal(k_b2, (NUM_LABELS,), jnp.float32) * 0.02

    # One-time weight prep (hoisted off the per-call path; folds 1/S into w1).
    params = prepare_head_params(w1, b1, w2, b2, seq_len=S)

    out = text_classifier_forward(last_hidden_state, *params)
    out = jax.block_until_ready(out)

    ref = reference_forward(last_hidden_state, w1, b1, w2, b2)

    assert out.shape == (B, NUM_LABELS)
    assert jnp.allclose(out, ref, atol=1e-3, rtol=1e-3), (out, ref)

    print("KERNEL_OK")
</pallas_src>

<mosaic_0001>
module attributes {stable_mosaic.version = 11 : i64} {
  func.func @classifier_head_kernel(%arg0: i32, %arg1: i32, %arg2: memref<2x8x768xf32, #tpu.memory_space<vmem>>, %arg3: memref<768x128xf32, #tpu.memory_space<vmem>>, %arg4: memref<1x128xf32, #tpu.memory_space<vmem>>, %arg5: memref<128x128xf32, #tpu.memory_space<vmem>>, %arg6: memref<1x128xf32, #tpu.memory_space<vmem>>, %arg7: memref<2x128xf32, #tpu.memory_space<vmem>>, %arg8: memref<2x768xf32, #tpu.memory_space<vmem>>) attributes {dimension_semantics = [#tpu.dimension_semantics<parallel>, #tpu.dimension_semantics<arbitrary>], iteration_bounds = array<i64: 1, 1>, scalar_prefetch = 0 : i64, scratch_operands = 1 : i64, tpu.core_type = #tpu.core_type<tc>, window_params = [{transform_indices = @transform_0, window_bounds = array<i64: 2, 8, 768>}, {pipeline_mode = #tpu.pipeline_mode<synchronous>, transform_indices = @transform_1, window_bounds = array<i64: 768, 128>}, {pipeline_mode = #tpu.pipeline_mode<synchronous>, transform_indices = @transform_2, window_bounds = array<i64: 1, 128>}, {pipeline_mode = #tpu.pipeline_mode<synchronous>, transform_indices = @transform_3, window_bounds = array<i64: 128, 128>}, {pipeline_mode = #tpu.pipeline_mode<synchronous>, transform_indices = @transform_4, window_bounds = array<i64: 1, 128>}, {transform_indices = @transform_5, window_bounds = array<i64: 2, 128>}]} {
    %c0_i32 = arith.constant 0 : i32
    %0 = arith.cmpi eq, %arg1, %c0_i32 : i32
    %1 = arith.extui %0 : i1 to i32
    %c0_i32_0 = arith.constant 0 : i32
    %2 = arith.cmpi ne, %1, %c0_i32_0 : i32
    scf.if %2 {
      %cst_9 = arith.constant 0.000000e+00 : f32
      %11 = vector.broadcast %cst_9 : f32 to vector<2x768xf32>
      %c0_10 = arith.constant 0 : index
      %c0_11 = arith.constant 0 : index
      %12 = vector.load %arg8[%c0_10, %c0_11] : memref<2x768xf32, #tpu.memory_space<vmem>>, vector<2x768xf32>
      tpu.vector_store %arg8[%c0_10, %c0_11], %11 {strides = array<i32>} : memref<2x768xf32, #tpu.memory_space<vmem>>, vector<2x768xf32>,
    } else {
    }
    %c0 = arith.constant 0 : index
    %c0_1 = arith.constant 0 : index
    %3 = vector.load %arg8[%c0, %c0_1] : memref<2x768xf32, #tpu.memory_space<vmem>>, vector<2x768xf32>
    %c0_2 = arith.constant 0 : index
    %c0_3 = arith.constant 0 : index
    %c0_4 = arith.constant 0 : index
    %4 = vector.load %arg2[%c0_2, %c0_3, %c0_4] : memref<2x8x768xf32, #tpu.memory_space<vmem>>, vector<2x8x768xf32>
    %cst = arith.constant dense<0.000000e+00> : vector<2x768xf32>
    %5 = vector.multi_reduction <add>, %4, %cst [1] : vector<2x8x768xf32> to vector<2x768xf32>
    %6 = arith.addf %3, %5 : vector<2x768xf32>
    %c0_5 = arith.constant 0 : index
    %c0_6 = arith.constant 0 : index
    %7 = vector.load %arg8[%c0_5, %c0_6] : memref<2x768xf32, #tpu.memory_space<vmem>>, vector<2x768xf32>
    tpu.vector_store %arg8[%c0_5, %c0_6], %6 {strides = array<i32>} : memref<2x768xf32, #tpu.memory_space<vmem>>, vector<2x768xf32>,
    %c0_i32_7 = arith.constant 0 : i32
    %8 = arith.cmpi eq, %arg1, %c0_i32_7 : i32
    %9 = arith.extui %8 : i1 to i32
    %c0_i32_8 = arith.constant 0 : i32
    %10 = arith.cmpi ne, %9, %c0_i32_8 : i32
    scf.if %10 {
      %c0_9 = arith.constant 0 : index
      %c0_10 = arith.constant 0 : index
      %11 = vector.load %arg8[%c0_9, %c0_10] : memref<2x768xf32, #tpu.memory_space<vmem>>, vector<2x768xf32>
      %c0_11 = arith.constant 0 : index
      %c0_12 = arith.constant 0 : index
      %12 = vector.load %arg3[%c0_11, %c0_12] : memref<768x128xf32, #tpu.memory_space<vmem>>, vector<768x128xf32>
      %cst_13 = arith.constant dense<0.000000e+00> : vector<2x128xf32>
      %13 = tpu.matmul %11, %12, %cst_13 {dimension_numbers = #tpu.dot_dimension_numbers<[1], [0], [0], [1], [0, 0, 1, 1], [], []>} : vector<2x768xf32>, vector<768x128xf32>, vector<2x128xf32> -> vector<2x128xf32>
      %c0_14 = arith.constant 0 : index
      %c0_15 = arith.constant 0 : index
      %14 = vector.load %arg4[%c0_14, %c0_15] : memref<1x128xf32, #tpu.memory_space<vmem>>, vector<1x128xf32>
      %15 = vector.broadcast %14 : vector<1x128xf32> to vector<2x128xf32>
      %16 = arith.addf %13, %15 : vector<2x128xf32>
      %17 = math.tanh %16 : vector<2x128xf32>
      %c0_16 = arith.constant 0 : index
      %c0_17 = arith.constant 0 : index
      %18 = vector.load %arg5[%c0_16, %c0_17] : memref<128x128xf32, #tpu.memory_space<vmem>>, vector<128x128xf32>
      %cst_18 = arith.constant dense<0.000000e+00> : vector<2x128xf32>
      %19 = tpu.matmul %17, %18, %cst_18 {dimension_numbers = #tpu.dot_dimension_numbers<[1], [0], [0], [1], [0, 0, 1, 1], [], []>} : vector<2x128xf32>, vector<128x128xf32>, vector<2x128xf32> -> vector<2x128xf32>
      %c0_19 = arith.constant 0 : index
      %c0_20 = arith.constant 0 : index
      %20 = vector.load %arg6[%c0_19, %c0_20] : memref<1x128xf32, #tpu.memory_space<vmem>>, vector<1x128xf32>
      %21 = vector.broadcast %20 : vector<1x128xf32> to vector<2x128xf32>
      %22 = arith.addf %19, %21 : vector<2x128xf32>
      %c0_21 = arith.constant 0 : index
      %c0_22 = arith.constant 0 : index
      %23 = vector.load %arg7[%c0_21, %c0_22] : memref<2x128xf32, #tpu.memory_space<vmem>>, vector<2x128xf32>
      tpu.vector_store %arg7[%c0_21, %c0_22], %22 {strides = array<i32>} : memref<2x128xf32, #tpu.memory_space<vmem>>, vector<2x128xf32>,
    } else {
    }
    return
  }
  func.func @transform_0(%arg0: i32, %arg1: i32) -> (i32, i32, i32) {
    %c0_i32 = arith.constant 0 : i32
    %c0_i32_0 = arith.constant 0 : i32
    return %arg0, %arg1, %c0_i32 : i32, i32, i32
  }
  func.func @transform_1(%arg0: i32, %arg1: i32) -> (i32, i32) {
    %c0_i32 = arith.constant 0 : i32
    %c0_i32_0 = arith.constant 0 : i32
    %c0_i32_1 = arith.constant 0 : i32
    return %c0_i32, %c0_i32_0 : i32, i32
  }
  func.func @transform_2(%arg0: i32, %arg1: i32) -> (i32, i32) {
    %c0_i32 = arith.constant 0 : i32
    %c0_i32_0 = arith.constant 0 : i32
    %c0_i32_1 = arith.constant 0 : i32
    return %c0_i32, %c0_i32_0 : i32, i32
  }
  func.func @transform_3(%arg0: i32, %arg1: i32) -> (i32, i32) {
    %c0_i32 = arith.constant 0 : i32
    %c0_i32_0 = arith.constant 0 : i32
    %c0_i32_1 = arith.constant 0 : i32
    return %c0_i32, %c0_i32_0 : i32, i32
  }
  func.func @transform_4(%arg0: i32, %arg1: i32) -> (i32, i32) {
    %c0_i32 = arith.constant 0 : i32
    %c0_i32_0 = arith.constant 0 : i32
    %c0_i32_1 = arith.constant 0 : i32
    return %c0_i32, %c0_i32_0 : i32, i32
  }
  func.func @transform_5(%arg0: i32, %arg1: i32) -> (i32, i32) {
    %c0_i32 = arith.constant 0 : i32
    %c0_i32_0 = arith.constant 0 : i32
    return %arg0, %c0_i32 : i32, i32
  }
}

</mosaic_0001>

<llo_original>
// kernel: text_classifier_forward.1
$region0: #{text_classifier_forward.1}
  #allocation0 [shape = 'u32[]', space=smem, size = 0x4, offset = 0x4, fixed_abs, tag = 'smem constant byte address 0x4 - core index']
  #allocation1 [shape = 'u32[144,128]{1,0:T(1,128)}', space=vmem, size = 0x12000, scoped, tag = 'internal scratch']
  #allocation2 [shape = 'f32[2,768]{1,0:T(2,128)}', space=vmem, size = 0x1800, scoped, tag = 'scratch operand']
  %s0 = inlined_call_operand.hbm [shape: f32[2,8,768], index: 0, kind: input, shape index: {}]
  %s1 = inlined_call_operand.hbm [shape: f32[768,128], index: 1, kind: input, shape index: {}]
  %s2 = inlined_call_operand.vmem [shape: f32[1,128], index: 2, kind: input, shape index: {}]
  %s3 = inlined_call_operand.hbm [shape: f32[128,128], index: 3, kind: input, shape index: {}]
  %s4 = inlined_call_operand.vmem [shape: f32[1,128], index: 4, kind: input, shape index: {}]
  %s5 = inlined_call_operand.hbm [shape: f32[2,128], index: 5, kind: output, shape index: {}]
  %s6 = sld [smem:[#allocation0]]
  $region50: #{text_classifier_forward.1} parent=0
    _
  %s8 = ssub.s32 1, %s6
  %s9 = scalar_select 0, %s8, %s6
  $region1: #{text_classifier_forward.1} parent=0
    #allocation3 [shape = 'u8[49152]{0}', space=vmem, size = 0xc000, scoped, tag = 'input window, operand 0, single buffered']
    #allocation4 [shape = 's32[1]{0}', space=sflag, size = 0x4, scoped, tag = 'scoped memory for text_classifier_forward.1']
    #allocation5 [shape = 's32[1]{0}', space=sflag, size = 0x4, scoped, tag = 'scoped memory for text_classifier_forward.1']
    #allocation6 [shape = 'u8[393216]{0}', space=vmem, size = 0x60000, scoped, tag = 'input window, operand 1, single buffered']
    #allocation7 [shape = 's32[1]{0}', space=sflag, size = 0x4, scoped, tag = 'scoped memory for text_classifier_forward.1']
    #allocation8 [shape = 'u8[65536]{0}', space=vmem, size = 0x10000, scoped, tag = 'input window, operand 3, single buffered']
    #allocation9 [shape = 'u8[1024]{0}', space=vmem, size = 0x400, scoped, tag = 'output window, operand 0, single buffered']
    %10 = vsyncpa [#allocation4], 0
    %11 = vsyncpa [#allocation7], 0
    %12 = vsyncpa [#allocation5], 0
    // Predicated region
    $region2: #{text_classifier_forward.1} parent=1 // pred_check
      _
    $region3: #{text_classifier_forward.1} parent=1 // pred_check_branch
      %14 = sbr.rel (0) target = $region5
    $region4: #{text_classifier_forward.1} parent=1 // pred_region
      %s16 = ssub.s32 1536, 1536
      %17 = vsyncadd [#allocation4], %s16
      %s18 = sshll.u32 [#allocation3], 4
      %s19 = int_to_ptr.vmem [resolvable:$true] %s18
      %24 = dma.hbm_to_vmem [thread:$0]  %s0, 1536, %s19, [#allocation4], 768, 768, 48
    $region5: #{text_classifier_forward.1} parent=1 // pred_fallthru
      _
    // Predicated region
    $region6: #{text_classifier_forward.1} parent=1 // pred_check
      _
    $region7: #{text_classifier_forward.1} parent=1 // pred_check_branch
      %26 = sbr.rel (0) target = $region9
    $region8: #{text_classifier_forward.1} parent=1 // pred_region
      %s28 = ssub.s32 12288, 12288
      %29 = vsyncadd [#allocation7], %s28
      %s30 = sshll.u32 [#allocation6], 4
      %s31 = int_to_ptr.vmem [resolvable:$true] %s30
      %36 = dma.hbm_to_vmem [thread:$0]  %s1, 12288, %s31, [#allocation7], 128, 128, 8
    $region9: #{text_classifier_forward.1} parent=1 // pred_fallthru
      _
    // Predicated region
    $region10: #{text_classifier_forward.1} parent=1 // pred_check
      _
    $region11: #{text_classifier_forward.1} parent=1 // pred_check_branch
      %38 = sbr.rel (0) target = $region13
    $region12: #{text_classifier_forward.1} parent=1 // pred_region
      _
    $region13: #{text_classifier_forward.1} parent=1 // pred_fallthru
      _
    // Predicated region
    $region14: #{text_classifier_forward.1} parent=1 // pred_check
      _
    $region15: #{text_classifier_forward.1} parent=1 // pred_check_branch
      %40 = sbr.rel (0) target = $region17
    $region16: #{text_classifier_forward.1} parent=1 // pred_region
      %s42 = ssub.s32 2048, 2048
      %43 = vsyncadd [#allocation7], %s42
      %s44 = sshll.u32 [#allocation8], 4
      %s45 = int_to_ptr.vmem [resolvable:$true] %s44
      %50 = dma.hbm_to_vmem [thread:$0]  %s3, 2048, %s45, [#allocation7], 128, 128, 8
    $region17: #{text_classifier_forward.1} parent=1 // pred_fallthru
      _
    // Predicated region
    $region18: #{text_classifier_forward.1} parent=1 // pred_check
      _
    $region19: #{text_classifier_forward.1} parent=1 // pred_check_branch
      %52 = sbr.rel (0) target = $region21
    $region20: #{text_classifier_forward.1} parent=1 // pred_region
      _
    $region21: #{text_classifier_forward.1} parent=1 // pred_fallthru
      _
    // Predicated region
    $region22: #{text_classifier_forward.1} parent=1 // pred_check
      _
    $region23: #{text_classifier_forward.1} parent=1 // pred_check_branch
      %54 = sbr.rel (0) target = $region25
    $region24: #{text_classifier_forward.1} parent=1 // pred_region
      %55 = dma.done [#allocation4], 1536
    $region25: #{text_classifier_forward.1} parent=1 // pred_fallthru
      _
    // Predicated region
    $region26: #{text_classifier_forward.1} parent=1 // pred_check
      _
    $region27: #{text_classifier_forward.1} parent=1 // pred_check_branch
      %57 = sbr.rel (0) target = $region29
    $region28: #{text_classifier_forward.1} parent=1 // pred_region
      %58 = dma.done [#allocation7], 12288
    $region29: #{text_classifier_forward.1} parent=1 // pred_fallthru
      _
    // Predicated region
    $region30: #{text_classifier_forward.1} parent=1 // pred_check
      _
    $region31: #{text_classifier_forward.1} parent=1 // pred_check_branch
      %60 = sbr.rel (0) target = $region33
    $region32: #{text_classifier_forward.1} parent=1 // pred_region
      %61 = dma.done [#allocation7], 2048
    $region33: #{text_classifier_forward.1} parent=1 // pred_fallthru
      _
    %p62 = scmp.eq.s32.totalorder 0, 0
    // Predicated region
    $region34: #{text_classifier_forward.1} parent=1 // pred_check
      %p63 = pneg %p62
    $region35: #{text_classifier_forward.1} parent=1 // pred_check_branch
      %65 = sbr.rel (%p63) target = $region37
    $region36: #{text_classifier_forward.1} parent=1 // pred_region
      %66 = vst [vmem:[#allocation2] sm:$0xff] 0.0
      %67 = vst [vmem:[#allocation2 + $0x8] sm:$0xf] 0.0
    $region37: #{text_classifier_forward.1} parent=1 // pred_fallthru
      _
    %v68 = vld [vmem:[#allocation2] sm:$0xff]
    %v69 = vld [vmem:[#allocation2 + $0x8] sm:$0xf]
    %v70 = vld [vmem:[#allocation3] sm:$0xff]
    %v71 = vld [vmem:[#allocation3 + $0x8] sm:$0xff]
    %v72 = vld [vmem:[#allocation3 + $0x10] sm:$0xff]
    %v73 = vld [vmem:[#allocation3 + $0x18] sm:$0xff]
    %v74 = vld [vmem:[#allocation3 + $0x20] sm:$0xff]
    %v75 = vld [vmem:[#allocation3 + $0x28] sm:$0xff]
    %v76 = vld [vmem:[#allocation3 + $0x30] sm:$0xff]
    %v77 = vld [vmem:[#allocation3 + $0x38] sm:$0xff]
    %v78 = vld [vmem:[#allocation3 + $0x40] sm:$0xff]
    %v79 = vld [vmem:[#allocation3 + $0x48] sm:$0xff]
    %v80 = vld [vmem:[#allocation3 + $0x50] sm:$0xff]
    %v81 = vld [vmem:[#allocation3 + $0x58] sm:$0xff]
    %v82 = vrot.slane %v70, 4
    %v83 = vadd.f32 %v70, %v82
    %v84 = vrot.slane %v83, 2
    %v85 = vadd.f32 %v83, %v84
    %v86 = vrot.slane %v85, 1
    %v87 = vadd.f32 %v85, %v86
    %v88 = vrot.slane %v71, 4
    %v89 = vadd.f32 %v71, %v88
    %v90 = vrot.slane %v89, 2
    %v91 = vadd.f32 %v89, %v90
    %v92 = vrot.slane %v91, 1
    %v93 = vadd.f32 %v91, %v92
    %v94 = vrot.slane %v72, 4
    %v95 = vadd.f32 %v72, %v94
    %v96 = vrot.slane %v95, 2
    %v97 = vadd.f32 %v95, %v96
    %v98 = vrot.slane %v97, 1
    %v99 = vadd.f32 %v97, %v98
    %v100 = vrot.slane %v73, 4
    %v101 = vadd.f32 %v73, %v100
    %v102 = vrot.slane %v101, 2
    %v103 = vadd.f32 %v101, %v102
    %v104 = vrot.slane %v103, 1
    %v105 = vadd.f32 %v103, %v104
    %v106 = vrot.slane %v74, 4
    %v107 = vadd.f32 %v74, %v106
    %v108 = vrot.slane %v107, 2
    %v109 = vadd.f32 %v107, %v108
    %v110 = vrot.slane %v109, 1
    %v111 = vadd.f32 %v109, %v110
    %v112 = vrot.slane %v75, 4
    %v113 = vadd.f32 %v75, %v112
    %v114 = vrot.slane %v113, 2
    %v115 = vadd.f32 %v113, %v114
    %v116 = vrot.slane %v115, 1
    %v117 = vadd.f32 %v115, %v116
    %v118 = vrot.slane %v76, 4
    %v119 = vadd.f32 %v76, %v118
    %v120 = vrot.slane %v119, 2
    %v121 = vadd.f32 %v119, %v120
    %v122 = vrot.slane %v121, 1
    %v123 = vadd.f32 %v121, %v122
    %v124 = vrot.slane %v77, 4
    %v125 = vadd.f32 %v77, %v124
    %v126 = vrot.slane %v125, 2
    %v127 = vadd.f32 %v125, %v126
    %v128 = vrot.slane %v127, 1
    %v129 = vadd.f32 %v127, %v128
    %v130 = vrot.slane %v78, 4
    %v131 = vadd.f32 %v78, %v130
    %v132 = vrot.slane %v131, 2
    %v133 = vadd.f32 %v131, %v132
    %v134 = vrot.slane %v133, 1
    %v135 = vadd.f32 %v133, %v134
    %v136 = vrot.slane %v79, 4
    %v137 = vadd.f32 %v79, %v136
    %v138 = vrot.slane %v137, 2
    %v139 = vadd.f32 %v137, %v138
    %v140 = vrot.slane %v139, 1
    %v141 = vadd.f32 %v139, %v140
    %v142 = vrot.slane %v80, 4
    %v143 = vadd.f32 %v80, %v142
    %v144 = vrot.slane %v143, 2
    %v145 = vadd.f32 %v143, %v144
    %v146 = vrot.slane %v145, 1
    %v147 = vadd.f32 %v145, %v146
    %v148 = vrot.slane %v81, 4
    %v149 = vadd.f32 %v81, %v148
    %v150 = vrot.slane %v149, 2
    %v151 = vadd.f32 %v149, %v150
    %v152 = vrot.slane %v151, 1
    %v153 = vadd.f32 %v151, %v152
    %v166 = vcombine.low %v87, %v93
    %v167 = vcombine.low %v99, %v105
    %v169 = vunpack.c.l.s4 1983009808
    %v170 = vunpack.c.0.s8 %v169
    %v171 = vlaneseq
    %v172 = vshrl.u32 %v171, 7
    %v173 = vsub.s32 %v170, %v172
    %v174 = vrot.slane %v166, %v173
    %v176 = vunpack.c.l.s4 1983009808
    %v177 = vunpack.c.0.s8 %v176
    %v178 = vlaneseq
    %v179 = vshrl.u32 %v178, 7
    %v180 = vsub.s32 %v177, %v179
    %v181 = vrot.slane %v167, %v180
    %v182 = vcombine.low %v174, %v181
    %v183 = vcombine.low %v111, %v117
    %v185 = vunpack.c.l.s4 1983009808
    %v186 = vunpack.c.0.s8 %v185
    %v187 = vlaneseq
    %v188 = vshrl.u32 %v187, 7
    %v189 = vsub.s32 %v186, %v188
    %v190 = vrot.slane %v183, %v189
    %v191 = vcombine.low %v123, %v129
    %v192 = vcombine.low %v135, %v141
    %v194 = vunpack.c.l.s4 1983009808
    %v195 = vunpack.c.0.s8 %v194
    %v196 = vlaneseq
    %v197 = vshrl.u32 %v196, 7
    %v198 = vsub.s32 %v195, %v197
    %v199 = vrot.slane %v191, %v198
    %v201 = vunpack.c.l.s4 1983009808
    %v202 = vunpack.c.0.s8 %v201
    %v203 = vlaneseq
    %v204 = vshrl.u32 %v203, 7
    %v205 = vsub.s32 %v202, %v204
    %v206 = vrot.slane %v192, %v205
    %v207 = vcombine.low %v199, %v206
    %v208 = vcombine.low %v147, %v153
    %v210 = vunpack.c.l.s4 1983009808
    %v211 = vunpack.c.0.s8 %v210
    %v212 = vlaneseq
    %v213 = vshrl.u32 %v212, 7
    %v214 = vsub.s32 %v211, %v213
    %v215 = vrot.slane %v208, %v214
    %vm216 = vcmask 1044484
    %v217 = vsel %vm216, %v182, %v182
    %vm218 = vcmask 1046534
    %v219 = vsel %vm218, %v182, %v217
    %v220 = vrot.slane %v207, 7
    %vm221 = vcmask 1041409
    %v222 = vsel %vm221, %v220, %v219
    %vm223 = vcmask 1043459
    %v224 = vsel %vm223, %v220, %v222
    %vm225 = vcmask 1045509
    %v226 = vsel %vm225, %v220, %v224
    %vm227 = vcmask 1047559
    %v228 = vsel %vm227, %v220, %v226
    %v229 = vsel %vm216, %v190, %v190
    %v230 = vsel %vm218, %v190, %v229
    %v231 = vrot.slane %v215, 7
    %v232 = vsel %vm221, %v231, %v230
    %v233 = vsel %vm223, %v231, %v232
    %v234 = vsel %vm225, %v231, %v233
    %v235 = vsel %vm227, %v231, %v234
    %v238 = vadd.f32 %v68, %v228
    %v239 = vadd.f32 %v69, %v235
    %240 = vst [vmem:[#allocation2] sm:$0xff] %v238
    %241 = vst [vmem:[#allocation2 + $0x8] sm:$0xf] %v239
    // Predicated region
    $region38: #{text_classifier_forward.1} parent=1 // pred_check
      %p242 = pneg %p62
    $region39: #{text_classifier_forward.1} parent=1 // pred_check_branch
      %244 = sbr.rel (%p242) target = $region41
    $region40: #{text_classifier_forward.1} parent=1 // pred_region
      %v245 = vld [vmem:[#allocation2] sm:$0xff]
      %v246 = vld [vmem:[#allocation2 + $0x8] sm:$0xf]
      %v247 = vld [vmem:[#allocation6] sm:$0xff]
      %v248 = vld [vmem:[#allocation6 + $0x8] sm:$0xff]
      %v249 = vld [vmem:[#allocation6 + $0x10] sm:$0xff]
      %v250 = vld [vmem:[#allocation6 + $0x18] sm:$0xff]
      %v251 = vld [vmem:[#allocation6 + $0x20] sm:$0xff]
      %v252 = vld [vmem:[#allocation6 + $0x28] sm:$0xff]
      %v253 = vld [vmem:[#allocation6 + $0x30] sm:$0xff]
      %v254 = vld [vmem:[#allocation6 + $0x38] sm:$0xff]
      %v255 = vld [vmem:[#allocation6 + $0x40] sm:$0xff]
      %v256 = vld [vmem:[#allocation6 + $0x48] sm:$0xff]
      %v257 = vld [vmem:[#allocation6 + $0x50] sm:$0xff]
      %v258 = vld [vmem:[#allocation6 + $0x58] sm:$0xff]
      %v259 = vld [vmem:[#allocation6 + $0x60] sm:$0xff]
      %v260 = vld [vmem:[#allocation6 + $0x68] sm:$0xff]
      %v261 = vld [vmem:[#allocation6 + $0x70] sm:$0xff]
      %v262 = vld [vmem:[#allocation6 + $0x78] sm:$0xff]
      %v263 = vld [vmem:[#allocation6 + $0x80] sm:$0xff]
      %v264 = vld [vmem:[#allocation6 + $0x88] sm:$0xff]
      %v265 = vld [vmem:[#allocation6 + $0x90] sm:$0xff]
      %v266 = vld [vmem:[#allocation6 + $0x98] sm:$0xff]
      %v267 = vld [vmem:[#allocation6 + $0xa0] sm:$0xff]
      %v268 = vld [vmem:[#allocation6 + $0xa8] sm:$0xff]
      %v269 = vld [vmem:[#allocation6 + $0xb0] sm:$0xff]
      %v270 = vld [vmem:[#allocation6 + $0xb8] sm:$0xff]
      %v271 = vld [vmem:[#allocation6 + $0xc0] sm:$0xff]
      %v272 = vld [vmem:[#allocation6 + $0xc8] sm:$0xff]
      %v273 = vld [vmem:[#allocation6 + $0xd0] sm:$0xff]
      %v274 = vld [vmem:[#allocation6 + $0xd8] sm:$0xff]
      %v275 = vld [vmem:[#allocation6 + $0xe0] sm:$0xff]
      %v276 = vld [vmem:[#allocation6 + $0xe8] sm:$0xff]
      %v277 = vld [vmem:[#allocation6 + $0xf0] sm:$0xff]
      %v278 = vld [vmem:[#allocation6 + $0xf8] sm:$0xff]
      %v279 = vld [vmem:[#allocation6 + $0x100] sm:$0xff]
      %v280 = vld [vmem:[#allocation6 + $0x108] sm:$0xff]
      %v281 = vld [vmem:[#allocation6 + $0x110] sm:$0xff]
      %v282 = vld [vmem:[#allocation6 + $0x118] sm:$0xff]
      %v283 = vld [vmem:[#allocation6 + $0x120] sm:$0xff]
      %v284 = vld [vmem:[#allocation6 + $0x128] sm:$0xff]
      %v285 = vld [vmem:[#allocation6 + $0x130] sm:$0xff]
      %v286 = vld [vmem:[#allocation6 + $0x138] sm:$0xff]
      %v287 = vld [vmem:[#allocation6 + $0x140] sm:$0xff]
      %v288 = vld [vmem:[#allocation6 + $0x148] sm:$0xff]
      %v289 = vld [vmem:[#allocation6 + $0x150] sm:$0xff]
      %v290 = vld [vmem:[#allocation6 + $0x158] sm:$0xff]
      %v291 = vld [vmem:[#allocation6 + $0x160] sm:$0xff]
      %v292 = vld [vmem:[#allocation6 + $0x168] sm:$0xff]
      %v293 = vld [vmem:[#allocation6 + $0x170] sm:$0xff]
      %v294 = vld [vmem:[#allocation6 + $0x178] sm:$0xff]
      %v295 = vld [vmem:[#allocation6 + $0x180] sm:$0xff]
      %v296 = vld [vmem:[#allocation6 + $0x188] sm:$0xff]
      %v297 = vld [vmem:[#allocation6 + $0x190] sm:$0xff]
      %v298 = vld [vmem:[#allocation6 + $0x198] sm:$0xff]
      %v299 = vld [vmem:[#allocation6 + $0x1a0] sm:$0xff]
      %v300 = vld [vmem:[#allocation6 + $0x1a8] sm:$0xff]
      %v301 = vld [vmem:[#allocation6 + $0x1b0] sm:$0xff]
      %v302 = vld [vmem:[#allocation6 + $0x1b8] sm:$0xff]
      %v303 = vld [vmem:[#allocation6 + $0x1c0] sm:$0xff]
      %v304 = vld [vmem:[#allocation6 + $0x1c8] sm:$0xff]
      %v305 = vld [vmem:[#allocation6 + $0x1d0] sm:$0xff]
      %v306 = vld [vmem:[#allocation6 + $0x1d8] sm:$0xff]
      %v307 = vld [vmem:[#allocation6 + $0x1e0] sm:$0xff]
      %v308 = vld [vmem:[#allocation6 + $0x1e8] sm:$0xff]
      %v309 = vld [vmem:[#allocation6 + $0x1f0] sm:$0xff]
      %v310 = vld [vmem:[#allocation6 + $0x1f8] sm:$0xff]
      %v311 = vld [vmem:[#allocation6 + $0x200] sm:$0xff]
      %v312 = vld [vmem:[#allocation6 + $0x208] sm:$0xff]
      %v313 = vld [vmem:[#allocation6 + $0x210] sm:$0xff]
      %v314 = vld [vmem:[#allocation6 + $0x218] sm:$0xff]
      %v315 = vld [vmem:[#allocation6 + $0x220] sm:$0xff]
      %v316 = vld [vmem:[#allocation6 + $0x228] sm:$0xff]
      %v317 = vld [vmem:[#allocation6 + $0x230] sm:$0xff]
      %v318 = vld [vmem:[#allocation6 + $0x238] sm:$0xff]
      %v319 = vld [vmem:[#allocation6 + $0x240] sm:$0xff]
      %v320 = vld [vmem:[#allocation6 + $0x248] sm:$0xff]
      %v321 = vld [vmem:[#allocation6 + $0x250] sm:$0xff]
      %v322 = vld [vmem:[#allocation6 + $0x258] sm:$0xff]
      %v323 = vld [vmem:[#allocation6 + $0x260] sm:$0xff]
      %v324 = vld [vmem:[#allocation6 + $0x268] sm:$0xff]
      %v325 = vld [vmem:[#allocation6 + $0x270] sm:$0xff]
      %v326 = vld [vmem:[#allocation6 + $0x278] sm:$0xff]
      %v327 = vld [vmem:[#allocation6 + $0x280] sm:$0xff]
      %v328 = vld [vmem:[#allocation6 + $0x288] sm:$0xff]
      %v329 = vld [vmem:[#allocation6 + $0x290] sm:$0xff]
      %v330 = vld [vmem:[#allocation6 + $0x298] sm:$0xff]
      %v331 = vld [vmem:[#allocation6 + $0x2a0] sm:$0xff]
      %v332 = vld [vmem:[#allocation6 + $0x2a8] sm:$0xff]
      %v333 = vld [vmem:[#allocation6 + $0x2b0] sm:$0xff]
      %v334 = vld [vmem:[#allocation6 + $0x2b8] sm:$0xff]
      %v335 = vld [vmem:[#allocation6 + $0x2c0] sm:$0xff]
      %v336 = vld [vmem:[#allocation6 + $0x2c8] sm:$0xff]
      %v337 = vld [vmem:[#allocation6 + $0x2d0] sm:$0xff]
      %v338 = vld [vmem:[#allocation6 + $0x2d8] sm:$0xff]
      %v339 = vld [vmem:[#allocation6 + $0x2e0] sm:$0xff]
      %v340 = vld [vmem:[#allocation6 + $0x2e8] sm:$0xff]
      %v341 = vld [vmem:[#allocation6 + $0x2f0] sm:$0xff]
      %v342 = vld [vmem:[#allocation6 + $0x2f8] sm:$0xff]
      %v343 = vld [vmem:[%s2] sm:$0x1]
      %v345 = vlaneseq
      %v346 = vshrl.u32 %v345, 7
      %v347 = vsub.s32 0, %v346
      %v348 = vrot.slane %v343, %v347
      %v352 = vcombine.high %v245, %v245
      %v354 = vunpack.c.l.s4 1983009808
      %v355 = vunpack.c.0.s8 %v354
      %v356 = vlaneseq
      %v357 = vshrl.u32 %v356, 7
      %v358 = vsub.s32 %v355, %v357
      %v359 = vrot.slane %v245, %v358
      %v361 = vunpack.c.l.s4 1983009808
      %v362 = vunpack.c.0.s8 %v361
      %v363 = vlaneseq
      %v364 = vshrl.u32 %v363, 7
      %v365 = vsub.s32 %v362, %v364
      %v366 = vrot.slane %v352, %v365
      %v367 = vcombine.high %v359, %v359
      %v368 = vcombine.high %v366, %v366
      %v370 = vunpack.c.l.s4 1983009808
      %v371 = vunpack.c.0.s8 %v370
      %v372 = vlaneseq
      %v373 = vshrl.u32 %v372, 7
      %v374 = vsub.s32 %v371, %v373
      %v375 = vrot.slane %v246, %v374
      %v376 = vcombine.high %v375, %v375
      %383 = vmatprep.subr.mxu0 0.0
      %384 = vmatpush1.msra.mxu0 %v247
      %385 = vmatprep.subr.mxu0 0.0
      %386 = vmatpush1.msra.mxu0 %v248
      %387 = vmatprep.subr.mxu0 0.0
      %388 = vmatpush1.msra.mxu0 %v249
      %389 = vmatprep.subr.mxu0 0.0
      %390 = vmatpush1.msra.mxu0 %v250
      %391 = vmatprep.subr.mxu0 0.0
      %392 = vmatpush1.msra.mxu0 %v251
      %393 = vmatprep.subr.mxu0 0.0
      %394 = vmatpush1.msra.mxu0 %v252
      %395 = vmatprep.subr.mxu0 0.0
      %396 = vmatpush1.msra.mxu0 %v253
      %397 = vmatprep.subr.mxu0 0.0
      %398 = vmatpush1.msra.mxu0 %v254
      %399 = vmatprep.subr.mxu0 0.0
      %400 = vmatpush1.msra.mxu0 %v255
      %401 = vmatprep.subr.mxu0 0.0
      %402 = vmatpush1.msra.mxu0 %v256
      %403 = vmatprep.subr.mxu0 0.0
      %404 = vmatpush1.msra.mxu0 %v257
      %405 = vmatprep.subr.mxu0 0.0
      %406 = vmatpush1.msra.mxu0 %v258
      %407 = vmatprep.subr.mxu0 0.0
      %408 = vmatpush1.msra.mxu0 %v259
      %409 = vmatprep.subr.mxu0 0.0
      %410 = vmatpush1.msra.mxu0 %v260
      %411 = vmatprep.subr.mxu0 0.0
      %412 = vmatpush1.msra.mxu0 %v261
      %413 = vmatprep.subr.mxu0 0.0
      %414 = vmatpush1.msra.mxu0 %v262
      %415 = vmatprep.subr.mxu0 0.0
      %416 = vmatpush1.msra.mxu0 %v263
      %417 = vmatprep.subr.mxu0 0.0
      %418 = vmatpush1.msra.mxu0 %v264
      %419 = vmatprep.subr.mxu0 0.0
      %420 = vmatpush1.msra.mxu0 %v265
      %421 = vmatprep.subr.mxu0 0.0
      %422 = vmatpush1.msra.mxu0 %v266
      %423 = vmatprep.subr.mxu0 0.0
      %424 = vmatpush1.msra.mxu0 %v267
      %425 = vmatprep.subr.mxu0 0.0
      %426 = vmatpush1.msra.mxu0 %v268
      %427 = vmatprep.subr.mxu0 0.0
      %428 = vmatpush1.msra.mxu0 %v269
      %429 = vmatprep.subr.mxu0 0.0
      %430 = vmatpush1.msra.mxu0 %v270
      %431 = vmatprep.subr.mxu0 0.0
      %432 = vmatpush1.msra.mxu0 %v271
      %433 = vmatprep.subr.mxu0 0.0
      %434 = vmatpush1.msra.mxu0 %v272
      %435 = vmatprep.subr.mxu0 0.0
      %436 = vmatpush1.msra.mxu0 %v273
      %437 = vmatprep.subr.mxu0 0.0
      %438 = vmatpush1.msra.mxu0 %v274
      %439 = vmatprep.subr.mxu0 0.0
      %440 = vmatpush1.msra.mxu0 %v275
      %441 = vmatprep.subr.mxu0 0.0
      %442 = vmatpush1.msra.mxu0 %v276
      %443 = vmatprep.subr.mxu0 0.0
      %444 = vmatpush1.msra.mxu0 %v277
      %445 = vmatprep.subr.mxu0 0.0
      %446 = vmatpush1.msra.mxu0 %v278
      %447 = vmatprep.mubr.f32.mxu0 %v367
      %448 = vmatmul.mubr.f32.gmra.mrb[0].mxu0 %v359
      %v449 = vpop.f32.mrb[0].mxu0
      %v450 = vadd.f32 %v348, %v449
      %v451 = vpop.f32.mrb[0].mxu0
      %452 = vdwg.mxu0
      %453 = vmatprep.subr.mxu0 0.0
      %454 = vmatpush1.msra.mxu0 %v279
      %455 = vmatprep.subr.mxu0 0.0
      %456 = vmatpush1.msra.mxu0 %v280
      %457 = vmatprep.subr.mxu0 0.0
      %458 = vmatpush1.msra.mxu0 %v281
      %459 = vmatprep.subr.mxu0 0.0
      %460 = vmatpush1.msra.mxu0 %v282
      %461 = vmatprep.subr.mxu0 0.0
      %462 = vmatpush1.msra.mxu0 %v283
      %463 = vmatprep.subr.mxu0 0.0
      %464 = vmatpush1.msra.mxu0 %v284
      %465 = vmatprep.subr.mxu0 0.0
      %466 = vmatpush1.msra.mxu0 %v285
      %467 = vmatprep.subr.mxu0 0.0
      %468 = vmatpush1.msra.mxu0 %v286
      %469 = vmatprep.subr.mxu0 0.0
      %470 = vmatpush1.msra.mxu0 %v287
      %471 = vmatprep.subr.mxu0 0.0
      %472 = vmatpush1.msra.mxu0 %v288
      %473 = vmatprep.subr.mxu0 0.0
      %474 = vmatpush1.msra.mxu0 %v289
      %475 = vmatprep.subr.mxu0 0.0
      %476 = vmatpush1.msra.mxu0 %v290
      %477 = vmatprep.subr.mxu0 0.0
      %478 = vmatpush1.msra.mxu0 %v291
      %479 = vmatprep.subr.mxu0 0.0
      %480 = vmatpush1.msra.mxu0 %v292
      %481 = vmatprep.subr.mxu0 0.0
      %482 = vmatpush1.msra.mxu0 %v293
      %483 = vmatprep.subr.mxu0 0.0
      %484 = vmatpush1.msra.mxu0 %v294
      %485 = vmatprep.subr.mxu0 0.0
      %486 = vmatpush1.msra.mxu0 %v295
      %487 = vmatprep.subr.mxu0 0.0
      %488 = vmatpush1.msra.mxu0 %v296
      %489 = vmatprep.subr.mxu0 0.0
      %490 = vmatpush1.msra.mxu0 %v297
      %491 = vmatprep.subr.mxu0 0.0
      %492 = vmatpush1.msra.mxu0 %v298
      %493 = vmatprep.subr.mxu0 0.0
      %494 = vmatpush1.msra.mxu0 %v299
      %495 = vmatprep.subr.mxu0 0.0
      %496 = vmatpush1.msra.mxu0 %v300
      %497 = vmatprep.subr.mxu0 0.0
      %498 = vmatpush1.msra.mxu0 %v301
      %499 = vmatprep.subr.mxu0 0.0
      %500 = vmatpush1.msra.mxu0 %v302
      %501 = vmatprep.subr.mxu0 0.0
      %502 = vmatpush1.msra.mxu0 %v303
      %503 = vmatprep.subr.mxu0 0.0
      %504 = vmatpush1.msra.mxu0 %v304
      %505 = vmatprep.subr.mxu0 0.0
      %506 = vmatpush1.msra.mxu0 %v305
      %507 = vmatprep.subr.mxu0 0.0
      %508 = vmatpush1.msra.mxu0 %v306
      %509 = vmatprep.subr.mxu0 0.0
      %510 = vmatpush1.msra.mxu0 %v307
      %511 = vmatprep.subr.mxu0 0.0
      %512 = vmatpush1.msra.mxu0 %v308
      %513 = vmatprep.subr.mxu0 0.0
      %514 = vmatpush1.msra.mxu0 %v309
      %515 = vmatprep.subr.mxu0 0.0
      %516 = vmatpush1.msra.mxu0 %v310
      %517 = vmatprep.mubr.f32.mxu0 %v368
      %518 = vmatmul.mubr.f32.gmra.mrb[0].mxu0 %v366
      %v519 = vpop.f32.mrb[0].mxu0
      %v520 = vadd.f32 %v450, %v519
      %v521 = vpop.f32.mrb[0].mxu0
      %522 = vdwg.mxu0
      %523 = vmatprep.subr.mxu0 0.0
      %524 = vmatpush1.msra.mxu0 %v311
      %525 = vmatprep.subr.mxu0 0.0
      %526 = vmatpush1.msra.mxu0 %v312
      %527 = vmatprep.subr.mxu0 0.0
      %528 = vmatpush1.msra.mxu0 %v313
      %529 = vmatprep.subr.mxu0 0.0
      %530 = vmatpush1.msra.mxu0 %v314
      %531 = vmatprep.subr.mxu0 0.0
      %532 = vmatpush1.msra.mxu0 %v315
      %533 = vmatprep.subr.mxu0 0.0
      %534 = vmatpush1.msra.mxu0 %v316
      %535 = vmatprep.subr.mxu0 0.0
      %536 = vmatpush1.msra.mxu0 %v317
      %537 = vmatprep.subr.mxu0 0.0
      %538 = vmatpush1.msra.mxu0 %v318
      %539 = vmatprep.subr.mxu0 0.0
      %540 = vmatpush1.msra.mxu0 %v319
      %541 = vmatprep.subr.mxu0 0.0
      %542 = vmatpush1.msra.mxu0 %v320
      %543 = vmatprep.subr.mxu0 0.0
      %544 = vmatpush1.msra.mxu0 %v321
      %545 = vmatprep.subr.mxu0 0.0
      %546 = vmatpush1.msra.mxu0 %v322
      %547 = vmatprep.subr.mxu0 0.0
      %548 = vmatpush1.msra.mxu0 %v323
      %549 = vmatprep.subr.mxu0 0.0
      %550 = vmatpush1.msra.mxu0 %v324
      %551 = vmatprep.subr.mxu0 0.0
      %552 = vmatpush1.msra.mxu0 %v325
      %553 = vmatprep.subr.mxu0 0.0
      %554 = vmatpush1.msra.mxu0 %v326
      %555 = vmatprep.subr.mxu0 0.0
      %556 = vmatpush1.msra.mxu0 %v327
      %557 = vmatprep.subr.mxu0 0.0
      %558 = vmatpush1.msra.mxu0 %v328
      %559 = vmatprep.subr.mxu0 0.0
      %560 = vmatpush1.msra.mxu0 %v329
      %561 = vmatprep.subr.mxu0 0.0
      %562 = vmatpush1.msra.mxu0 %v330
      %563 = vmatprep.subr.mxu0 0.0
      %564 = vmatpush1.msra.mxu0 %v331
      %565 = vmatprep.subr.mxu0 0.0
      %566 = vmatpush1.msra.mxu0 %v332
      %567 = vmatprep.subr.mxu0 0.0
      %568 = vmatpush1.msra.mxu0 %v333
      %569 = vmatprep.subr.mxu0 0.0
      %570 = vmatpush1.msra.mxu0 %v334
      %571 = vmatprep.subr.mxu0 0.0
      %572 = vmatpush1.msra.mxu0 %v335
      %573 = vmatprep.subr.mxu0 0.0
      %574 = vmatpush1.msra.mxu0 %v336
      %575 = vmatprep.subr.mxu0 0.0
      %576 = vmatpush1.msra.mxu0 %v337
      %577 = vmatprep.subr.mxu0 0.0
      %578 = vmatpush1.msra.mxu0 %v338
      %579 = vmatprep.subr.mxu0 0.0
      %580 = vmatpush1.msra.mxu0 %v339
      %581 = vmatprep.subr.mxu0 0.0
      %582 = vmatpush1.msra.mxu0 %v340
      %583 = vmatprep.subr.mxu0 0.0
      %584 = vmatpush1.msra.mxu0 %v341
      %585 = vmatprep.subr.mxu0 0.0
      %586 = vmatpush1.msra.mxu0 %v342
      %587 = vmatprep.mubr.f32.mxu0 %v376
      %588 = vmatmul.mubr.f32.gmra.mrb[0].mxu0 %v375
      %v589 = vpop.f32.mrb[0].mxu0
      %v590 = vadd.f32 %v520, %v589
      %v591 = vpop.f32.mrb[0].mxu0
      %592 = vdwg.mxu0
      %v593 = vtanh.pop %v590
      %v594 = vld [vmem:[#allocation8] sm:$0xff]
      %v595 = vld [vmem:[#allocation8 + $0x8] sm:$0xff]
      %v596 = vld [vmem:[#allocation8 + $0x10] sm:$0xff]
      %v597 = vld [vmem:[#allocation8 + $0x18] sm:$0xff]
      %v598 = vld [vmem:[#allocation8 + $0x20] sm:$0xff]
      %v599 = vld [vmem:[#allocation8 + $0x28] sm:$0xff]
      %v600 = vld [vmem:[#allocation8 + $0x30] sm:$0xff]
      %v601 = vld [vmem:[#allocation8 + $0x38] sm:$0xff]
      %v602 = vld [vmem:[#allocation8 + $0x40] sm:$0xff]
      %v603 = vld [vmem:[#allocation8 + $0x48] sm:$0xff]
      %v604 = vld [vmem:[#allocation8 + $0x50] sm:$0xff]
      %v605 = vld [vmem:[#allocation8 + $0x58] sm:$0xff]
      %v606 = vld [vmem:[#allocation8 + $0x60] sm:$0xff]
      %v607 = vld [vmem:[#allocation8 + $0x68] sm:$0xff]
      %v608 = vld [vmem:[#allocation8 + $0x70] sm:$0xff]
      %v609 = vld [vmem:[#allocation8 + $0x78] sm:$0xff]
      %v610 = vld [vmem:[%s4] sm:$0x1]
      %v612 = vlaneseq
      %v613 = vshrl.u32 %v612, 7
      %v614 = vsub.s32 0, %v613
      %v615 = vrot.slane %v610, %v614
      %617 = vmatprep.subr.mxu0 0.0
      %618 = vmatpush1.msra.mxu0 %v594
      %619 = vmatprep.subr.mxu0 0.0
      %620 = vmatpush1.msra.mxu0 %v595
      %621 = vmatprep.subr.mxu0 0.0
      %622 = vmatpush1.msra.mxu0 %v596
      %623 = vmatprep.subr.mxu0 0.0
      %624 = vmatpush1.msra.mxu0 %v597
      %625 = vmatprep.subr.mxu0 0.0
      %626 = vmatpush1.msra.mxu0 %v598
      %627 = vmatprep.subr.mxu0 0.0
      %628 = vmatpush1.msra.mxu0 %v599
      %629 = vmatprep.subr.mxu0 0.0
      %630 = vmatpush1.msra.mxu0 %v600
      %631 = vmatprep.subr.mxu0 0.0
      %632 = vmatpush1.msra.mxu0 %v601
      %633 = vmatprep.subr.mxu0 0.0
      %634 = vmatpush1.msra.mxu0 %v602
      %635 = vmatprep.subr.mxu0 0.0
      %636 = vmatpush1.msra.mxu0 %v603
      %637 = vmatprep.subr.mxu0 0.0
      %638 = vmatpush1.msra.mxu0 %v604
      %639 = vmatprep.subr.mxu0 0.0
      %640 = vmatpush1.msra.mxu0 %v605
      %641 = vmatprep.subr.mxu0 0.0
      %642 = vmatpush1.msra.mxu0 %v606
      %643 = vmatprep.subr.mxu0 0.0
      %644 = vmatpush1.msra.mxu0 %v607
      %645 = vmatprep.subr.mxu0 0.0
      %646 = vmatpush1.msra.mxu0 %v608
      %647 = vmatprep.subr.mxu0 0.0
      %648 = vmatpush1.msra.mxu0 %v609
      %649 = vmatprep.subr.mxu0 0.0
      %650 = vmatpush1.msra.mxu0 0.0
      %651 = vmatprep.subr.mxu0 0.0
      %652 = vmatpush1.msra.mxu0 0.0
      %653 = vmatprep.subr.mxu0 0.0
      %654 = vmatpush1.msra.mxu0 0.0
      %655 = vmatprep.subr.mxu0 0.0
      %656 = vmatpush1.msra.mxu0 0.0
      %657 = vmatprep.subr.mxu0 0.0
      %658 = vmatpush1.msra.mxu0 0.0
      %659 = vmatprep.subr.mxu0 0.0
      %660 = vmatpush1.msra.mxu0 0.0
      %661 = vmatprep.subr.mxu0 0.0
      %662 = vmatpush1.msra.mxu0 0.0
      %663 = vmatprep.subr.mxu0 0.0
      %664 = vmatpush1.msra.mxu0 0.0
      %665 = vmatprep.subr.mxu0 0.0
      %666 = vmatpush1.msra.mxu0 0.0
      %667 = vmatprep.subr.mxu0 0.0
      %668 = vmatpush1.msra.mxu0 0.0
      %669 = vmatprep.subr.mxu0 0.0
      %670 = vmatpush1.msra.mxu0 0.0
      %671 = vmatprep.subr.mxu0 0.0
      %672 = vmatpush1.msra.mxu0 0.0
      %673 = vmatprep.subr.mxu0 0.0
      %674 = vmatpush1.msra.mxu0 0.0
      %675 = vmatprep.subr.mxu0 0.0
      %676 = vmatpush1.msra.mxu0 0.0
      %677 = vmatprep.subr.mxu0 0.0
      %678 = vmatpush1.msra.mxu0 0.0
      %679 = vmatprep.subr.mxu0 0.0
      %680 = vmatpush1.msra.mxu0 0.0
      %681 = vmatprep.mubr.f32.mxu0 0.0
      %682 = vmatmul.mubr.f32.gmra.mrb[0].mxu0 %v593
      %v683 = vpop.f32.mrb[0].mxu0
      %v684 = vadd.f32 %v615, %v683
      %v685 = vpop.f32.mrb[0].mxu0
      %686 = vdwg.mxu0
      %687 = vst [vmem:[#allocation9] sm:$0x3] %v684
    $region41: #{text_classifier_forward.1} parent=1 // pred_fallthru
      _
    // Predicated region
    $region42: #{text_classifier_forward.1} parent=1 // pred_check
      _
    $region43: #{text_classifier_forward.1} parent=1 // pred_check_branch
      %689 = sbr.rel (0) target = $region45
    $region44: #{text_classifier_forward.1} parent=1 // pred_region
      %s691 = ssub.s32 32, 32
      %692 = vsyncadd [#allocation5], %s691
      %s694 = sshll.u32 [#allocation9], 4
      %s695 = int_to_ptr.vmem [resolvable:$true] %s694
      %697 = dma.vmem_to_hbm [thread:$0]  %s695, 32, %s5, [#allocation5]
    $region45: #{text_classifier_forward.1} parent=1 // pred_fallthru
      _
    // Predicated region
    $region46: #{text_classifier_forward.1} parent=1 // pred_check
      _
    $region47: #{text_classifier_forward.1} parent=1 // pred_check_branch
      %699 = sbr.rel (0) target = $region49
    $region48: #{text_classifier_forward.1} parent=1 // pred_region
      %700 = dma.done [#allocation5], 32
    $region49: #{text_classifier_forward.1} parent=1 // pred_fallthru
      _
    %701 = vsyncpa [#allocation4], 1
    %702 = vsyncpa [#allocation7], 1
    %703 = vsyncpa [#allocation5], 1

</llo_original>
